<compile_context>
chip_gen: v7x
topology: tpu7x:2x2x1
jax: 0.10.0
libtpu: 0.0.40
codegen_flags: <defaults>
</compile_context>

<pallas_src>
import functools

import jax
import jax.numpy as jnp
from jax.experimental import pallas as pl
from jax.experimental.pallas import tpu as pltpu


def _round_up(n: int, m: int) -> int:
    return ((n + m - 1) // m) * m


def _vmem_ceiling_bytes() -> int:
    """Per-generation VMEM ceiling (leave headroom below physical capacity)."""
    cap = None
    try:
        cap = int(getattr(pltpu.get_tpu_info(), "vmem_capacity_bytes"))
    except Exception:
        cap = None
    if not cap or cap <= 0:
        cap = 64 << 20  # conservative: assume v7x-class 64 MiB / TensorCore
    # v7x (64 MiB physical) -> ~56 MiB; v5e/v6e (128 MiB) -> 100 MiB cap.
    return int(min(cap - (8 << 20), 100 << 20))


# ----------------------------------------------------------------------------
# Kernels
# ----------------------------------------------------------------------------


def _resident_kernel(x_ref, w_ref, b_ref, o_ref):
    # x_ref: (tb, F_in_pad) caller dtype; w_ref: (F_in_pad, F_out_pad) bf16;
    # b_ref: (1, F_out_pad) f32 (padded lanes = -1e30); o_ref: (tb, F_out_pad).
    xb = x_ref[...].astype(jnp.bfloat16)                       # cast in VMEM
    logits = jnp.dot(xb, w_ref[...],
                     preferred_element_type=jnp.float32) + b_ref[...]
    # Padded class lanes carry a -1e30 bias (zero weight columns), so they
    # never win the max and contribute 0 to the sum -- no in-kernel mask.
    m = jnp.max(logits, axis=-1, keepdims=True)
    shifted = logits - m
    lse = jnp.log(jnp.sum(jnp.exp(shifted), axis=-1, keepdims=True))
    o_ref[...] = (shifted - lse).astype(o_ref.dtype)


def _make_ntiled_kernel(nj: int, tn: int):
    """Class-tiled path: online log-softmax across the F_out grid axis."""

    def kernel(x_ref, w_ref, b_ref, o_ref, logits_sc, m_sc, l_sc):
        j = pl.program_id(1)

        @pl.when(j == 0)
        def _():
            m_sc[...] = jnp.full_like(m_sc, -jnp.inf)
            l_sc[...] = jnp.zeros_like(l_sc)

        xb = x_ref[...].astype(jnp.bfloat16)
        logits = jnp.dot(xb, w_ref[...],
                         preferred_element_type=jnp.float32) + b_ref[...]
        logits_sc[j] = logits                                  # park raw f32 logits

        m_prev = m_sc[...]
        m_new = jnp.maximum(m_prev, jnp.max(logits, axis=-1, keepdims=True))
        l_sc[...] = (jnp.exp(m_prev - m_new) * l_sc[...]
                     + jnp.sum(jnp.exp(logits - m_new), axis=-1, keepdims=True))
        m_sc[...] = m_new

        @pl.when(j == nj - 1)
        def _():
            lse = m_sc[...] + jnp.log(l_sc[...])
            for jj in range(nj):                               # static, lane-aligned
                o_ref[:, jj * tn:(jj + 1) * tn] = (
                    logits_sc[jj] - lse).astype(o_ref.dtype)

    return kernel


# ----------------------------------------------------------------------------
# Tiling plan
# ----------------------------------------------------------------------------


def _plan(B, F_in_pad, F_out_pad, xbytes, obytes, budget, force_n_tiling):
    WB = 2  # bf16 weight bytes
    b_cap = max(16, _round_up(B, 16))
    pref = min(256, b_cap)
    tb_cands = [pref] + [t for t in (128, 64, 32, 16) if t < pref]

    if not force_n_tiling:
        for tb in tb_cands:
            need = (F_in_pad * F_out_pad * WB          # resident weight (1-buffered)
                    + F_out_pad * 4                    # bias (1-buffered)
                    + 2 * tb * F_in_pad * xbytes       # x tile (double-buffered)
                    + 2 * tb * F_out_pad * obytes)     # out tile (double-buffered)
            if need <= budget:
                return "resident", tb, None, need

    for tb in tb_cands:
        for tn in (2048, 1024, 512, 256, 128):
            if tn > F_out_pad or F_out_pad % tn:
                continue
            need = (2 * F_in_pad * tn * WB             # streamed weight tiles
                    + 2 * tn * 4                       # bias tiles
                    + 2 * tb * F_in_pad * xbytes       # x tile
                    + 2 * tb * F_out_pad * obytes      # out block (resident over j)
                    + tb * F_out_pad * 4               # f32 logits scratch
                    + 4 * tb * 4)                      # m / l scratch
            if need <= budget:
                return "n_tiled", tb, tn, need
    # TODO(synk): for F_out so large that even one (tb, F_out_pad) out block
    # exceeds VMEM, add a two-pass variant (lse pass + normalize pass) with
    # N-tiled output blocks instead of a resident out row-block.
    return "n_tiled", 16, 128, budget


# ----------------------------------------------------------------------------
# Wrapper
# ----------------------------------------------------------------------------


@functools.partial(jax.jit, static_argnames=("force_n_tiling",))
def linear_cls_head(x, w_t, b, *, force_n_tiling: bool = False):
    """x: (B, F_in); w_t: (F_in, F_out) (nn.Linear weight transposed);
    b: (F_out,).  Returns (B, F_out) log-probabilities (LogSoftmax over dim 1)."""
    B, F_in = x.shape
    F_in_w, F_out = w_t.shape
    assert F_in == F_in_w and b.shape == (F_out,)
    out_dtype = x.dtype
    xbytes = jnp.dtype(x.dtype).itemsize
    obytes = jnp.dtype(out_dtype).itemsize

    F_in_pad = _round_up(F_in, 128)
    F_out_pad = _round_up(F_out, 128)

    ceiling = _vmem_ceiling_bytes()
    mode, tb, tn, need = _plan(B, F_in_pad, F_out_pad, xbytes, obytes,
                               ceiling - (4 << 20), force_n_tiling)
    B_pad = _round_up(max(B, tb), tb)

    # ---- padding (no wrapper-side dtype cast of x) --------------------------
    x_p = x
    if (B_pad, F_in_pad) != (B, F_in):
        x_p = jnp.pad(x, ((0, B_pad - B), (0, F_in_pad - F_in)))
    w_p = w_t
    if (F_in_pad, F_out_pad) != (F_in, F_out):
        w_p = jnp.pad(w_t, ((0, F_in_pad - F_in), (0, F_out_pad - F_out)))
    if w_p.dtype != jnp.bfloat16:
        # One extra HBM pass over W only if it doesn't already arrive as bf16;
        # store it as bf16 at the framework level to make this a no-op.
        w_p = w_p.astype(jnp.bfloat16)
    # Bake the padded-class-lane mask into the bias: padded weight columns are
    # zero, so -1e30 bias => padded logits ~ -1e30 (lose the max, add 0 to the
    # sum).  The final slice drops those lanes.
    b_p = b.astype(jnp.float32)
    if F_out_pad != F_out:
        b_p = jnp.pad(b_p, ((0, F_out_pad - F_out),), constant_values=-1e30)
    b2 = b_p.reshape(1, F_out_pad)

    vmem_limit = int(min(max(need + (4 << 20), 16 << 20), ceiling))
    cost = pl.CostEstimate(
        flops=2 * B_pad * F_in_pad * F_out_pad,
        transcendentals=B_pad * F_out_pad,
        bytes_accessed=(B_pad * F_in_pad * xbytes
                        + F_in_pad * F_out_pad * 2
                        + F_out_pad * 4
                        + B_pad * F_out_pad * obytes),
    )

    if mode == "resident":
        out = pl.pallas_call(
            _resident_kernel,
            out_shape=jax.ShapeDtypeStruct((B_pad, F_out_pad), out_dtype),
            grid_spec=pltpu.PrefetchScalarGridSpec(
                num_scalar_prefetch=0,
                grid=(B_pad // tb,),
                in_specs=[
                    pl.BlockSpec((tb, F_in_pad), lambda i: (i, 0)),
                    # Constant across the grid -> single-buffered (half VMEM).
                    pl.BlockSpec((F_in_pad, F_out_pad), lambda i: (0, 0),
                                 pipeline_mode=pl.Buffered(1)),
                    pl.BlockSpec((1, F_out_pad), lambda i: (0, 0),
                                 pipeline_mode=pl.Buffered(1)),
                ],
                out_specs=pl.BlockSpec((tb, F_out_pad), lambda i: (i, 0)),
            ),
            compiler_params=pltpu.CompilerParams(
                dimension_semantics=("parallel",),
                vmem_limit_bytes=vmem_limit,
            ),
            cost_estimate=cost,
        )(x_p, w_p, b2)
    else:
        nj = F_out_pad // tn
        out = pl.pallas_call(
            _make_ntiled_kernel(nj, tn),
            out_shape=jax.ShapeDtypeStruct((B_pad, F_out_pad), out_dtype),
            grid_spec=pltpu.PrefetchScalarGridSpec(
                num_scalar_prefetch=0,
                grid=(B_pad // tb, nj),
                in_specs=[
                    pl.BlockSpec((tb, F_in_pad), lambda i, j: (i, 0)),
                    pl.BlockSpec((F_in_pad, tn), lambda i, j: (0, j)),
                    pl.BlockSpec((1, tn), lambda i, j: (0, j)),
                ],
                out_specs=pl.BlockSpec((tb, F_out_pad), lambda i, j: (i, 0)),
                scratch_shapes=[
                    pltpu.VMEM((nj, tb, tn), jnp.float32),  # parked raw logits
                    pltpu.VMEM((tb, 1), jnp.float32),       # running max
                    pltpu.VMEM((tb, 1), jnp.float32),       # running sum-exp
                ],
            ),
            compiler_params=pltpu.CompilerParams(
                dimension_semantics=("parallel", "arbitrary"),
                vmem_limit_bytes=vmem_limit,
            ),
            cost_estimate=cost,
        )(x_p, w_p, b2)

    # Drop padded rows / padded class lanes.
    return out[:B, :F_out]


# ----------------------------------------------------------------------------
# Self-test
# ----------------------------------------------------------------------------

if __name__ == "__main__":
    key = jax.random.PRNGKey(0)

    def make_case(k, B, F_in, F_out):
        kx, kw, kb = jax.random.split(k, 3)
        x = jax.random.normal(kx, (B, F_in), dtype=jnp.float32)
        w = jax.random.normal(kw, (F_out, F_in), dtype=jnp.float32) * (1.0 / jnp.sqrt(F_in))
        bias = jax.random.normal(kb, (F_out,), dtype=jnp.float32) * 0.01
        return x, w.T, bias  # w.T => kernel computes x @ W^T + b like nn.Linear

    def check(out, x, w_t, bias):
        # Strict reference: same bf16 rounding of operands, f32 accumulation.
        xb = x.astype(jnp.bfloat16).astype(jnp.float32)
        wb = w_t.astype(jnp.bfloat16).astype(jnp.float32)
        ref = jax.nn.log_softmax(xb @ wb + bias, axis=1)
        assert out.shape == ref.shape
        assert jnp.allclose(out, ref, atol=2e-3, rtol=2e-3)
        # Loose sanity check against full-f32 module semantics.
        ref32 = jax.nn.log_softmax(x @ w_t + bias, axis=1)
        assert jnp.allclose(out, ref32, atol=5e-2, rtol=5e-2)

    k1, k2 = jax.random.split(key)

    # Case 1: ragged batch, unaligned F_in / F_out -> resident-weight path.
    x1, w1, b1 = make_case(k1, 12, 32, 100)
    out1 = jax.block_until_ready(linear_cls_head(x1, w1, b1))
    assert out1.shape == (12, 100)
    check(out1, x1, w1, b1)

    # Case 2: force the N-tiled online-log-softmax path (the fallback used by
    # huge heads / v7x) so both code paths are exercised on hardware.
    x2, w2, b2 = make_case(k2, 20, 48, 300)
    out2 = jax.block_until_ready(linear_cls_head(x2, w2, b2, force_n_tiling=True))
    assert out2.shape == (20, 300)
    check(out2, x2, w2, b2)

    print("KERNEL_OK")
</pallas_src>

<mosaic_0001>
module attributes {stable_mosaic.version = 11 : i64} {
  func.func @_resident_kernel(%arg0: i32, %arg1: memref<16x128xf32, #tpu.memory_space<vmem>>, %arg2: memref<128x128xbf16, #tpu.memory_space<vmem>>, %arg3: memref<1x128xf32, #tpu.memory_space<vmem>>, %arg4: memref<16x128xf32, #tpu.memory_space<vmem>>) attributes {dimension_semantics = [#tpu.dimension_semantics<parallel>], iteration_bounds = array<i64: 1>, scalar_prefetch = 0 : i64, scratch_operands = 0 : i64, tpu.core_type = #tpu.core_type<tc>, window_params = [{transform_indices = @transform_0, window_bounds = array<i64: 16, 128>}, {pipeline_mode = #tpu.pipeline_mode<synchronous>, transform_indices = @transform_1, window_bounds = array<i64: 128, 128>}, {pipeline_mode = #tpu.pipeline_mode<synchronous>, transform_indices = @transform_2, window_bounds = array<i64: 1, 128>}, {transform_indices = @transform_3, window_bounds = array<i64: 16, 128>}]} {
    %c0 = arith.constant 0 : index
    %c0_0 = arith.constant 0 : index
    %0 = vector.load %arg1[%c0, %c0_0] : memref<16x128xf32, #tpu.memory_space<vmem>>, vector<16x128xf32>
    %1 = arith.truncf %0 : vector<16x128xf32> to vector<16x128xbf16>
    %c0_1 = arith.constant 0 : index
    %c0_2 = arith.constant 0 : index
    %2 = vector.load %arg2[%c0_1, %c0_2] : memref<128x128xbf16, #tpu.memory_space<vmem>>, vector<128x128xbf16>
    %cst = arith.constant dense<0.000000e+00> : vector<16x128xf32>
    %3 = tpu.matmul %1, %2, %cst {dimension_numbers = #tpu.dot_dimension_numbers<[1], [0], [0], [1], [0, 0, 1, 1], [], []>} : vector<16x128xbf16>, vector<128x128xbf16>, vector<16x128xf32> -> vector<16x128xf32>
    %c0_3 = arith.constant 0 : index
    %c0_4 = arith.constant 0 : index
    %4 = vector.load %arg3[%c0_3, %c0_4] : memref<1x128xf32, #tpu.memory_space<vmem>>, vector<1x128xf32>
    %5 = vector.broadcast %4 : vector<1x128xf32> to vector<16x128xf32>
    %6 = arith.addf %3, %5 : vector<16x128xf32>
    %cst_5 = arith.constant dense<0xFF800000> : vector<16xf32>
    %7 = vector.multi_reduction <maximumf>, %6, %cst_5 [1] : vector<16x128xf32> to vector<16xf32>
    %8 = vector.shape_cast %7 : vector<16xf32> to vector<16x1xf32>
    %9 = vector.broadcast %8 : vector<16x1xf32> to vector<16x128xf32>
    %10 = arith.subf %6, %9 : vector<16x128xf32>
    %11 = math.exp %10 : vector<16x128xf32>
    %cst_6 = arith.constant dense<0.000000e+00> : vector<16xf32>
    %12 = vector.multi_reduction <add>, %11, %cst_6 [1] : vector<16x128xf32> to vector<16xf32>
    %13 = vector.shape_cast %12 : vector<16xf32> to vector<16x1xf32>
    %14 = math.log %13 : vector<16x1xf32>
    %15 = vector.broadcast %14 : vector<16x1xf32> to vector<16x128xf32>
    %16 = arith.subf %10, %15 : vector<16x128xf32>
    %c0_7 = arith.constant 0 : index
    %c0_8 = arith.constant 0 : index
    %17 = vector.load %arg4[%c0_7, %c0_8] : memref<16x128xf32, #tpu.memory_space<vmem>>, vector<16x128xf32>
    tpu.vector_store %arg4[%c0_7, %c0_8], %16 {strides = array<i32>} : memref<16x128xf32, #tpu.memory_space<vmem>>, vector<16x128xf32>,
    return
  }
  func.func @transform_0(%arg0: i32) -> (i32, i32) {
    %c0_i32 = arith.constant 0 : i32
    %c0_i32_0 = arith.constant 0 : i32
    return %arg0, %c0_i32 : i32, i32
  }
  func.func @transform_1(%arg0: i32) -> (i32, i32) {
    %c0_i32 = arith.constant 0 : i32
    %c0_i32_0 = arith.constant 0 : i32
    %c0_i32_1 = arith.constant 0 : i32
    return %c0_i32, %c0_i32_0 : i32, i32
  }
  func.func @transform_2(%arg0: i32) -> (i32, i32) {
    %c0_i32 = arith.constant 0 : i32
    %c0_i32_0 = arith.constant 0 : i32
    %c0_i32_1 = arith.constant 0 : i32
    return %c0_i32, %c0_i32_0 : i32, i32
  }
  func.func @transform_3(%arg0: i32) -> (i32, i32) {
    %c0_i32 = arith.constant 0 : i32
    %c0_i32_0 = arith.constant 0 : i32
    return %arg0, %c0_i32 : i32, i32
  }
}

</mosaic_0001>

<llo_original>
// kernel: linear_cls_head.1
$region0: #{linear_cls_head.1}
  #allocation0 [shape = 'u32[]', space=smem, size = 0x4, offset = 0x4, fixed_abs, tag = 'smem constant byte address 0x4 - core index']
  #allocation1 [shape = 'u32[144,128]{1,0:T(1,128)}', space=vmem, size = 0x12000, scoped, tag = 'internal scratch']
  %s0 = inlined_call_operand.vmem [shape: f32[16,128], index: 0, kind: input, shape index: {}]
  %s1 = inlined_call_operand.vmem [shape: bf16[128,128], index: 1, kind: input, shape index: {}]
  %s2 = inlined_call_operand.vmem [shape: f32[1,128], index: 2, kind: input, shape index: {}]
  %s3 = inlined_call_operand.hbm [shape: f32[16,128], index: 3, kind: output, shape index: {}]
  %s4 = sld [smem:[#allocation0]]
  $region22: #{linear_cls_head.1} parent=0
    _
  %s6 = ssub.s32 1, %s4
  %s7 = scalar_select 0, %s6, %s4
  $region1: #{linear_cls_head.1} parent=0
    #allocation2 [shape = 'u8[8192]{0}', space=vmem, size = 0x2000, scoped, tag = 'output window, operand 0, single buffered']
    #allocation3 [shape = 's32[1]{0}', space=sflag, size = 0x4, scoped, tag = 'scoped memory for linear_cls_head.1']
    %8 = vsyncpa [#allocation3], 0
    // Predicated region
    $region2: #{linear_cls_head.1} parent=1 // pred_check
      _
    $region3: #{linear_cls_head.1} parent=1 // pred_check_branch
      %10 = sbr.rel (0) target = $region5
    $region4: #{linear_cls_head.1} parent=1 // pred_region
      _
    $region5: #{linear_cls_head.1} parent=1 // pred_fallthru
      _
    // Predicated region
    $region6: #{linear_cls_head.1} parent=1 // pred_check
      _
    $region7: #{linear_cls_head.1} parent=1 // pred_check_branch
      %12 = sbr.rel (0) target = $region9
    $region8: #{linear_cls_head.1} parent=1 // pred_region
      _
    $region9: #{linear_cls_head.1} parent=1 // pred_fallthru
      _
    // Predicated region
    $region10: #{linear_cls_head.1} parent=1 // pred_check
      _
    $region11: #{linear_cls_head.1} parent=1 // pred_check_branch
      %14 = sbr.rel (0) target = $region13
    $region12: #{linear_cls_head.1} parent=1 // pred_region
      _
    $region13: #{linear_cls_head.1} parent=1 // pred_fallthru
      _
    %v16 = vld [vmem:[%s0] sm:$0xff]
    %v17 = vld [vmem:[%s0 + $0x8] sm:$0xff]
    %v18 = vpack.c.bf16 %v17, %v16
    %v19 = vld [vmem:[%s1] sm:$0xf]
    %v20 = vld [vmem:[%s1 + $0x4] sm:$0xf]
    %v21 = vld [vmem:[%s1 + $0x8] sm:$0xf]
    %v22 = vld [vmem:[%s1 + $0xc] sm:$0xf]
    %v23 = vld [vmem:[%s1 + $0x10] sm:$0xf]
    %v24 = vld [vmem:[%s1 + $0x14] sm:$0xf]
    %v25 = vld [vmem:[%s1 + $0x18] sm:$0xf]
    %v26 = vld [vmem:[%s1 + $0x1c] sm:$0xf]
    %v27 = vld [vmem:[%s1 + $0x20] sm:$0xf]
    %v28 = vld [vmem:[%s1 + $0x24] sm:$0xf]
    %v29 = vld [vmem:[%s1 + $0x28] sm:$0xf]
    %v30 = vld [vmem:[%s1 + $0x2c] sm:$0xf]
    %v31 = vld [vmem:[%s1 + $0x30] sm:$0xf]
    %v32 = vld [vmem:[%s1 + $0x34] sm:$0xf]
    %v33 = vld [vmem:[%s1 + $0x38] sm:$0xf]
    %v34 = vld [vmem:[%s1 + $0x3c] sm:$0xf]
    %v35 = vld [vmem:[%s2] sm:$0x1]
    %v37 = vlaneseq
    %v38 = vshrl.u32 %v37, 7
    %v39 = vsub.s32 0, %v38
    %v40 = vrot.slane %v35, %v39
    %v58 = vunpack.c.l.b16 %v19
    %v59 = vunpack.c.l.b16 %v20
    %v60 = vunpack.c.l.b16 %v21
    %v61 = vunpack.c.l.b16 %v22
    %v62 = vunpack.c.l.b16 %v23
    %v63 = vunpack.c.l.b16 %v24
    %v64 = vunpack.c.l.b16 %v25
    %v65 = vunpack.c.l.b16 %v26
    %v66 = vunpack.c.l.b16 %v27
    %v67 = vunpack.c.l.b16 %v28
    %v68 = vunpack.c.l.b16 %v29
    %v69 = vunpack.c.l.b16 %v30
    %v70 = vunpack.c.l.b16 %v31
    %v71 = vunpack.c.l.b16 %v32
    %v72 = vunpack.c.l.b16 %v33
    %v73 = vunpack.c.l.b16 %v34
    %v74 = vpack.c.b16 %v59, %v58
    %v75 = vpack.c.b16 %v61, %v60
    %v76 = vpack.c.b16 %v63, %v62
    %v77 = vpack.c.b16 %v65, %v64
    %v78 = vpack.c.b16 %v67, %v66
    %v79 = vpack.c.b16 %v69, %v68
    %v80 = vpack.c.b16 %v71, %v70
    %v81 = vpack.c.b16 %v73, %v72
    %90 = vmatprep.subr.bf16.mxu0 0
    %91 = vmatpush1.bf16.msra.mxu0 %v74
    %92 = vmatprep.subr.bf16.mxu0 0
    %93 = vmatpush1.bf16.msra.mxu0 %v75
    %94 = vmatprep.subr.bf16.mxu0 0
    %95 = vmatpush1.bf16.msra.mxu0 %v76
    %96 = vmatprep.subr.bf16.mxu0 0
    %97 = vmatpush1.bf16.msra.mxu0 %v77
    %98 = vmatprep.subr.bf16.mxu0 0
    %99 = vmatpush1.bf16.msra.mxu0 %v78
    %100 = vmatprep.subr.bf16.mxu0 0
    %101 = vmatpush1.bf16.msra.mxu0 %v79
    %102 = vmatprep.subr.bf16.mxu0 0
    %103 = vmatpush1.bf16.msra.mxu0 %v80
    %104 = vmatprep.subr.bf16.mxu0 0
    %105 = vmatpush1.bf16.msra.mxu0 %v81
    %106 = vmatprep.subr.bf16.mxu0 0
    %107 = vmatpush1.bf16.msra.mxu0 0
    %108 = vmatprep.subr.bf16.mxu0 0
    %109 = vmatpush1.bf16.msra.mxu0 0
    %110 = vmatprep.subr.bf16.mxu0 0
    %111 = vmatpush1.bf16.msra.mxu0 0
    %112 = vmatprep.subr.bf16.mxu0 0
    %113 = vmatpush1.bf16.msra.mxu0 0
    %114 = vmatprep.subr.bf16.mxu0 0
    %115 = vmatpush1.bf16.msra.mxu0 0
    %116 = vmatprep.subr.bf16.mxu0 0
    %117 = vmatpush1.bf16.msra.mxu0 0
    %118 = vmatprep.subr.bf16.mxu0 0
    %119 = vmatpush1.bf16.msra.mxu0 0
    %120 = vmatprep.subr.bf16.mxu0 0
    %121 = vmatpush1.bf16.msra.mxu0 0
    %122 = vmatprep.mubr.bf16.mxu0 0
    %123 = vmatmul.mubr.bf16.gmra.mrb[0].mxu0 %v18
    %v124 = vpop.f32.mrb[0].mxu0
    %v125 = vadd.f32 %v40, %v124
    %v126 = vpop.f32.mrb[0].mxu0
    %v127 = vpop.f32.mrb[0].mxu0
    %v128 = vadd.f32 %v40, %v127
    %v129 = vpop.f32.mrb[0].mxu0
    %130 = vdwg.mxu0
    %131 = vmax.xlane.f32.xlu0 %v125
    %v132 = vpop.xlane.xlu0 %131
    %133 = vmax.xlane.f32.xlu0 %v128
    %v134 = vpop.xlane.xlu0 %133
    %v135 = vsub.f32 %v125, %v132
    %v136 = vsub.f32 %v128, %v134
    %v137 = vmul.f32 %v135, 1.442695
    %v138 = vpow.pop %v137
    %v139 = vmul.f32 %v136, 1.442695
    %v140 = vpow.pop %v139
    %141 = vadd.xlane.f32.xlu0 %v138
    %v142 = vpop.xlane.xlu0 %141
    %143 = vadd.xlane.f32.xlu0 %v140
    %v144 = vpop.xlane.xlu0 %143
    %v145 = vlog2.pop %v142
    %v146 = vmul.f32 %v145, 0.6931472
    %v147 = vlog2.pop %v144
    %v148 = vmul.f32 %v147, 0.6931472
    %v149 = vsub.f32 %v135, %v146
    %v150 = vsub.f32 %v136, %v148
    %151 = vst [vmem:[#allocation2] sm:$0xff] %v149
    %152 = vst [vmem:[#allocation2 + $0x8] sm:$0xff] %v150
    // Predicated region
    $region14: #{linear_cls_head.1} parent=1 // pred_check
      _
    $region15: #{linear_cls_head.1} parent=1 // pred_check_branch
      %154 = sbr.rel (0) target = $region17
    $region16: #{linear_cls_head.1} parent=1 // pred_region
      %s156 = ssub.s32 256, 256
      %157 = vsyncadd [#allocation3], %s156
      %s158 = sshll.u32 [#allocation2], 4
      %s159 = int_to_ptr.vmem [resolvable:$true] %s158
      %164 = dma.vmem_to_hbm [thread:$0]  %s159, 256, %s3, [#allocation3], 128, 128, 8
    $region17: #{linear_cls_head.1} parent=1 // pred_fallthru
      _
    // Predicated region
    $region18: #{linear_cls_head.1} parent=1 // pred_check
      _
    $region19: #{linear_cls_head.1} parent=1 // pred_check_branch
      %166 = sbr.rel (0) target = $region21
    $region20: #{linear_cls_head.1} parent=1 // pred_region
      %167 = dma.done [#allocation3], 256
    $region21: #{linear_cls_head.1} parent=1 // pred_fallthru
      _
    %168 = vsyncpa [#allocation3], 1

</llo_original>
